<compile_context>
chip_gen: v6e
topology: v6e:2x2x1
jax: 0.10.0
libtpu: 0.0.40
codegen_flags: <defaults>
</compile_context>

<pallas_src>
import jax
import jax.numpy as jnp
from jax.experimental import pallas as pl
from jax.experimental.pallas import tpu as pltpu


def _round_up(x: int, m: int) -> int:
    return ((x + m - 1) // m) * m


# --------------------------------------------------------------------------
# One-time parameter preparation (do NOT re-run per forward call).
# --------------------------------------------------------------------------
def prepare_fast_rcnn_head_params(wc, bc, wb, bb):
    """Fuse cls + bbox Linear params into one lane-dense [C, 512k] matrix."""
    C = wc.shape[0]
    assert wb.shape[0] == C, "wc / wb in_channels mismatch"
    num_classes = wc.shape[1]
    num_bbox = wb.shape[1]
    out_dim = num_classes + num_bbox

    w_cat = jnp.concatenate([wc, wb], axis=1)            # (C, out_dim)
    b_cat = jnp.concatenate([bc, bb], axis=0)            # (out_dim,)

    # Pad output lanes to a multiple of 128 (unmasked lane-dense stores).
    out_pad = _round_up(out_dim, 128)
    if out_pad != out_dim:
        w_cat = jnp.pad(w_cat, ((0, 0), (0, out_pad - out_dim)))
        b_cat = jnp.pad(b_cat, (0, out_pad - out_dim))

    return {
        "w_cat": w_cat.astype(jnp.bfloat16),              # (C, out_pad) bf16
        "b_cat": b_cat.reshape(1, out_pad).astype(jnp.float32),
        "in_channels": C,
        "num_classes": num_classes,
        "num_bbox": num_bbox,
        "out_dim": out_dim,
    }


# --------------------------------------------------------------------------
# Kernel: one fused MXU matmul per ROI tile; bf16 cast happens on the VPU.
# --------------------------------------------------------------------------
def _fused_head_kernel(x_ref, w_ref, b_ref, out_ref):
    # x: (tm, C) f32 ; w: (C, OUT_pad) bf16 ; b: (1, OUT_pad) f32
    x_bf = x_ref[...].astype(jnp.bfloat16)                # free VPU slack
    out_ref[...] = (
        jnp.dot(x_bf, w_ref[...], preferred_element_type=jnp.float32)
        + b_ref[...]
    )


def _pick_tile(n_rows: int) -> int:
    """Row-tile size: big tiles for mem-bound GEMM, but keep >=2 grid steps
    when possible so v7x's two TensorCores both get work."""
    if n_rows < 128:
        return max(16, _round_up(n_rows, 16))             # bf16 sublane packing
    return min(512, _round_up(pl.cdiv(n_rows, 2), 16))


# --------------------------------------------------------------------------
# Forward
# --------------------------------------------------------------------------
def fast_rcnn_predictor_forward(params, x_nchw):
    """x_nchw: [N, C, 1, 1] pooled ROI features (NCHW). Returns dict of f32."""
    assert x_nchw.ndim == 4 and x_nchw.shape[2] == 1 and x_nchw.shape[3] == 1
    N, C = x_nchw.shape[0], x_nchw.shape[1]
    assert C == params["in_channels"], "in_channels mismatch with head params"

    num_classes = params["num_classes"]
    out_dim = params["out_dim"]
    w_cat = params["w_cat"]
    b_cat = params["b_cat"]
    out_pad = w_cat.shape[1]

    # Empty proposal set (real runtime case after NMS).
    if N == 0:
        return {
            "scores": jnp.zeros((0, num_classes), jnp.float32),
            "bbox_deltas": jnp.zeros((0, params["num_bbox"]), jnp.float32),
        }

    x = x_nchw.reshape(N, C)                               # f32, no extra cast pass

    # Tiny-N fast path: pallas_call fixed launch overhead dwarfs the compute.
    if N <= 16:
        fused = (
            jnp.dot(x.astype(jnp.bfloat16), w_cat,
                    preferred_element_type=jnp.float32)
            + b_cat
        )
        return {
            "scores": fused[:, :num_classes],
            "bbox_deltas": fused[:, num_classes:out_dim],
        }

    tm = _pick_tile(N)
    grid_m = pl.cdiv(N, tm)                                # ragged last block OK
    semantics = ("parallel",) if grid_m > 1 else ("arbitrary",)

    fused = pl.pallas_call(
        _fused_head_kernel,
        out_shape=jax.ShapeDtypeStruct((N, out_pad), jnp.float32),
        grid=(grid_m,),
        in_specs=[
            pl.BlockSpec((tm, C), lambda i: (i, 0)),        # x tile (f32)
            pl.BlockSpec((C, out_pad), lambda i: (0, 0)),   # weights, VMEM-resident
            pl.BlockSpec((1, out_pad), lambda i: (0, 0)),   # bias, VMEM-resident
        ],
        out_specs=pl.BlockSpec((tm, out_pad), lambda i: (i, 0)),
        compiler_params=pltpu.CompilerParams(
            dimension_semantics=semantics),
    )(x, w_cat, b_cat)

    # Slice off lane padding and split the fused output back out.
    return {
        "scores": fused[:, :num_classes],
        "bbox_deltas": fused[:, num_classes:out_dim],
    }


if __name__ == "__main__":
    # Small, deterministic setup consistent with the FastRCNNPredictor head.
    N = 300            # number of ROI proposals (exercises the tiled path)
    C = 256            # in_channels (representation size), kept small
    NUM_CLASSES = 91   # COCO default in the module signature

    key = jax.random.PRNGKey(0)
    kx, kwc, kbc, kwb, kbb = jax.random.split(key, 5)

    # Pooled ROI features, NCHW with 1x1 spatial (as asserted by the head).
    x = jax.random.normal(kx, (N, C, 1, 1), dtype=jnp.float32)

    # PyTorch nn.Linear default init: U(-1/sqrt(fan_in), 1/sqrt(fan_in)).
    bound = 1.0 / (C ** 0.5)
    wc = jax.random.uniform(kwc, (C, NUM_CLASSES), jnp.float32, -bound, bound)
    bc = jax.random.uniform(kbc, (NUM_CLASSES,), jnp.float32, -bound, bound)
    wb = jax.random.uniform(kwb, (C, NUM_CLASSES * 4), jnp.float32, -bound, bound)
    bb = jax.random.uniform(kbb, (NUM_CLASSES * 4,), jnp.float32, -bound, bound)

    # One-time parameter prep (hoisted out of the forward path).
    params = prepare_fast_rcnn_head_params(wc, bc, wb, bb)

    out = fast_rcnn_predictor_forward(params, x)
    jax.block_until_ready(out)

    # Cross-check against plain-JAX references.
    xf = x.reshape(N, C)
    ref_scores_f32 = xf @ wc + bc
    ref_bbox_f32 = xf @ wb + bb
    # bf16-input reference (same precision as the kernel's MXU inputs).
    xb = xf.astype(jnp.bfloat16)
    ref_scores_bf = jnp.dot(xb, wc.astype(jnp.bfloat16),
                            preferred_element_type=jnp.float32) + bc
    ref_bbox_bf = jnp.dot(xb, wb.astype(jnp.bfloat16),
                          preferred_element_type=jnp.float32) + bb

    assert out["scores"].shape == (N, NUM_CLASSES)
    assert out["bbox_deltas"].shape == (N, NUM_CLASSES * 4)
    assert jnp.allclose(out["scores"], ref_scores_bf, atol=2e-3, rtol=2e-3)
    assert jnp.allclose(out["bbox_deltas"], ref_bbox_bf, atol=2e-3, rtol=2e-3)
    assert jnp.allclose(out["scores"], ref_scores_f32, atol=5e-2, rtol=5e-2)
    assert jnp.allclose(out["bbox_deltas"], ref_bbox_f32, atol=5e-2, rtol=5e-2)

    # Sanity-check the tiny-N fast path and the empty-proposal guard.
    out_small = fast_rcnn_predictor_forward(params, x[:8])
    jax.block_until_ready(out_small)
    assert out_small["scores"].shape == (8, NUM_CLASSES)
    assert jnp.allclose(out_small["scores"], ref_scores_bf[:8],
                        atol=2e-3, rtol=2e-3)
    out_empty = fast_rcnn_predictor_forward(params, x[:0])
    assert out_empty["scores"].shape == (0, NUM_CLASSES)
    assert out_empty["bbox_deltas"].shape == (0, NUM_CLASSES * 4)

    print("KERNEL_OK")
</pallas_src>

<mosaic_0001>
module attributes {stable_mosaic.version = 11 : i64} {
  func.func @_fused_head_kernel(%arg0: i32, %arg1: memref<160x256xf32, #tpu.memory_space<vmem>>, %arg2: memref<256x512xbf16, #tpu.memory_space<vmem>>, %arg3: memref<1x512xf32, #tpu.memory_space<vmem>>, %arg4: memref<160x512xf32, #tpu.memory_space<vmem>>) attributes {dimension_semantics = [#tpu.dimension_semantics<parallel>], iteration_bounds = array<i64: 2>, scalar_prefetch = 0 : i64, scratch_operands = 0 : i64, tpu.core_type = #tpu.core_type<tc>, window_params = [{transform_indices = @transform_0, window_bounds = array<i64: 160, 256>}, {pipeline_mode = #tpu.pipeline_mode<synchronous>, transform_indices = @transform_1, window_bounds = array<i64: 256, 512>}, {pipeline_mode = #tpu.pipeline_mode<synchronous>, transform_indices = @transform_2, window_bounds = array<i64: 1, 512>}, {transform_indices = @transform_3, window_bounds = array<i64: 160, 512>}]} {
    %c0 = arith.constant 0 : index
    %c0_0 = arith.constant 0 : index
    %0 = vector.load %arg1[%c0, %c0_0] : memref<160x256xf32, #tpu.memory_space<vmem>>, vector<160x256xf32>
    %1 = arith.truncf %0 : vector<160x256xf32> to vector<160x256xbf16>
    %c0_1 = arith.constant 0 : index
    %c0_2 = arith.constant 0 : index
    %2 = vector.load %arg2[%c0_1, %c0_2] : memref<256x512xbf16, #tpu.memory_space<vmem>>, vector<256x512xbf16>
    %cst = arith.constant dense<0.000000e+00> : vector<160x512xf32>
    %3 = tpu.matmul %1, %2, %cst {dimension_numbers = #tpu.dot_dimension_numbers<[1], [0], [0], [1], [0, 0, 1, 1], [], []>} : vector<160x256xbf16>, vector<256x512xbf16>, vector<160x512xf32> -> vector<160x512xf32>
    %c0_3 = arith.constant 0 : index
    %c0_4 = arith.constant 0 : index
    %4 = vector.load %arg3[%c0_3, %c0_4] : memref<1x512xf32, #tpu.memory_space<vmem>>, vector<1x512xf32>
    %5 = vector.broadcast %4 : vector<1x512xf32> to vector<160x512xf32>
    %6 = arith.addf %3, %5 : vector<160x512xf32>
    %c0_5 = arith.constant 0 : index
    %c0_6 = arith.constant 0 : index
    %7 = vector.load %arg4[%c0_5, %c0_6] : memref<160x512xf32, #tpu.memory_space<vmem>>, vector<160x512xf32>
    tpu.vector_store %arg4[%c0_5, %c0_6], %6 {strides = array<i32>} : memref<160x512xf32, #tpu.memory_space<vmem>>, vector<160x512xf32>,
    return
  }
  func.func @transform_0(%arg0: i32) -> (i32, i32) {
    %c0_i32 = arith.constant 0 : i32
    %c0_i32_0 = arith.constant 0 : i32
    return %arg0, %c0_i32 : i32, i32
  }
  func.func @transform_1(%arg0: i32) -> (i32, i32) {
    %c0_i32 = arith.constant 0 : i32
    %c0_i32_0 = arith.constant 0 : i32
    %c0_i32_1 = arith.constant 0 : i32
    return %c0_i32, %c0_i32_0 : i32, i32
  }
  func.func @transform_2(%arg0: i32) -> (i32, i32) {
    %c0_i32 = arith.constant 0 : i32
    %c0_i32_0 = arith.constant 0 : i32
    %c0_i32_1 = arith.constant 0 : i32
    return %c0_i32, %c0_i32_0 : i32, i32
  }
  func.func @transform_3(%arg0: i32) -> (i32, i32) {
    %c0_i32 = arith.constant 0 : i32
    %c0_i32_0 = arith.constant 0 : i32
    return %arg0, %c0_i32 : i32, i32
  }
}

</mosaic_0001>

<llo_original>
// kernel: tpu_custom_call.1
$region0: #{tpu_custom_call.1}
  #allocation0 [shape = 'u32[]', space=smem, size = 0x4, offset = 0x4, fixed_abs, tag = 'smem constant byte address 0x4 - core index']
  #allocation1 [shape = 'u32[144,128]{1,0:T(1,128)}', space=vmem, size = 0x12000, scoped, tag = 'internal scratch']
  %s0 = inlined_call_operand.hbm [shape: f32[300,256], index: 0, kind: input, shape index: {}]
  %s1 = inlined_call_operand.hbm [shape: bf16[256,512], index: 1, kind: input, shape index: {}]
  %s2 = inlined_call_operand.hbm [shape: f32[1,512], index: 2, kind: input, shape index: {}]
  %s3 = inlined_call_operand.hbm [shape: f32[300,512], index: 3, kind: output, shape index: {}]
  %s4 = sld [smem:[#allocation0]]
  $region57: #{tpu_custom_call.1} parent=0
    _
  %s6 = ssub.s32 1, %s4
  %s7 = scalar_select 0, %s6, %s4
  $region1: #{tpu_custom_call.1} parent=0
    #allocation2 [shape = 'u8[327680]{0}', space=vmem, size = 0x50000, scoped, tag = 'input window, operand 0']
    #allocation3 [shape = 's32[2]{0}', space=sflag, size = 0x8, scoped, tag = 'scoped memory for tpu_custom_call.1']
    #allocation4 [shape = 's32[2]{0}', space=sflag, size = 0x8, scoped, tag = 'scoped memory for tpu_custom_call.1']
    #allocation5 [shape = 'u8[262144]{0}', space=vmem, size = 0x40000, scoped, tag = 'input window, operand 1, single buffered']
    #allocation6 [shape = 's32[1]{0}', space=sflag, size = 0x4, scoped, tag = 'scoped memory for tpu_custom_call.1']
    #allocation7 [shape = 'u8[2048]{0}', space=vmem, size = 0x800, scoped, tag = 'input window, operand 2, single buffered']
    #allocation8 [shape = 'u8[655360]{0}', space=vmem, size = 0xa0000, scoped, tag = 'output window, operand 0']
    %8 = vsyncpa [#allocation3], 0
    %s9 = scalar_lea.sflag [#allocation3], 1
    %10 = vsyncpa %s9, 0
    %11 = vsyncpa [#allocation6], 0
    %12 = vsyncpa [#allocation4], 0
    %s13 = scalar_lea.sflag [#allocation4], 1
    %14 = vsyncpa %s13, 0
    loop: start=0, step=1, limit=4
    $region2: #{tpu_custom_call.1} parent=1 // loop_pre_header
      _
    $region3: #{tpu_custom_call.1} parent=1 // loop_header
      %s16 = sphi 0, %s20
      %p17 = scmp.ge.s32.totalorder %s16, 4
      %s26 = sphi 0, %s28
      %s29 = sphi 0, %s26
      %s30 = sphi 0, %s29
      %s46 = sphi 0, %s30
      %s50 = sphi 0, %s50
      %s52 = sphi 0, %s50
      %s53 = sphi 0, %s52
      %s67 = sphi 0, %s53
      %s71 = sphi 0, %s71
      %s73 = sphi 0, %s71
      %s74 = sphi 0, %s73
      %s88 = sphi 0, %s74
      %s94 = sphi 0, %s96
      %s97 = sphi 0, %s94
      %s98 = sphi 0, %s97
      %s114 = sphi 0, %s98
    $region4: #{tpu_custom_call.1} parent=1 // loop_header_branch
      %19 = sbr.rel (%p17) target = $region8
    $region5: #{tpu_custom_call.1} parent=1 // loop_body
      %s21 = ssub.s32 %s16, 1
      %s22 = ssub.s32 %s16, 2
      %s23 = sadd.s32 %s16, 1
      %s24 = ssub.s32 %s16, %s23
      %p25 = scmp.eq.s32.totalorder %s24, 0
      %s27 = sadd.s32 %s26, 1
      %s28 = scalar_select %p25, %s26, %s27
      %p31 = pneg %p25
      %p32 = scmp.eq.s32.totalorder %s16, 1
      %p33 = por %p31, %p32
      %p34 = scmp.ne.s32.totalorder %s26, %s29
      %p35 = scmp.eq.s32.totalorder %s16, 0
      %p36 = por %p34, %p35
      %p37 = scmp.ne.s32.totalorder %s26, %s29
      %p38 = scmp.eq.s32.totalorder %s21, 1
      %p39 = por %p37, %p38
      %p40 = scmp.ne.s32.totalorder %s29, %s30
      %p41 = scmp.eq.s32.totalorder %s21, 0
      %p42 = por %p40, %p41
      %p43 = scmp.ne.s32.totalorder %s29, %s30
      %p44 = scmp.eq.s32.totalorder %s22, 1
      %p45 = por %p43, %p44
      %p47 = scmp.ne.s32.totalorder %s30, %s46
      %p48 = scmp.eq.s32.totalorder %s22, 0
      %p49 = por %p47, %p48
      %s51 = sadd.s32 %s50, 1
      %p54 = scmp.eq.s32.totalorder %s16, 1
      %p55 = scmp.ne.s32.totalorder %s50, %s52
      %p56 = scmp.eq.s32.totalorder %s16, 0
      %p57 = por %p55, %p56
      %p58 = scmp.ne.s32.totalorder %s50, %s52
      %p59 = scmp.eq.s32.totalorder %s21, 1
      %p60 = por %p58, %p59
      %p61 = scmp.ne.s32.totalorder %s52, %s53
      %p62 = scmp.eq.s32.totalorder %s21, 0
      %p63 = por %p61, %p62
      %p64 = scmp.ne.s32.totalorder %s52, %s53
      %p65 = scmp.eq.s32.totalorder %s22, 1
      %p66 = por %p64, %p65
      %p68 = scmp.ne.s32.totalorder %s53, %s67
      %p69 = scmp.eq.s32.totalorder %s22, 0
      %p70 = por %p68, %p69
      %s72 = sadd.s32 %s71, 1
      %p75 = scmp.eq.s32.totalorder %s16, 1
      %p76 = scmp.ne.s32.totalorder %s71, %s73
      %p77 = scmp.eq.s32.totalorder %s16, 0
      %p78 = por %p76, %p77
      %p79 = scmp.ne.s32.totalorder %s71, %s73
      %p80 = scmp.eq.s32.totalorder %s21, 1
      %p81 = por %p79, %p80
      %p82 = scmp.ne.s32.totalorder %s73, %s74
      %p83 = scmp.eq.s32.totalorder %s21, 0
      %p84 = por %p82, %p83
      %p85 = scmp.ne.s32.totalorder %s73, %s74
      %p86 = scmp.eq.s32.totalorder %s22, 1
      %p87 = por %p85, %p86
      %p89 = scmp.ne.s32.totalorder %s74, %s88
      %p90 = scmp.eq.s32.totalorder %s22, 0
      %p91 = por %p89, %p90
      %s92 = ssub.s32 %s16, %s23
      %p93 = scmp.eq.s32.totalorder %s92, 0
      %s95 = sadd.s32 %s94, 1
      %s96 = scalar_select %p93, %s94, %s95
      %p99 = pneg %p93
      %p100 = scmp.eq.s32.totalorder %s16, 1
      %p101 = por %p99, %p100
      %p102 = scmp.ne.s32.totalorder %s94, %s97
      %p103 = scmp.eq.s32.totalorder %s16, 0
      %p104 = por %p102, %p103
      %p105 = scmp.ne.s32.totalorder %s94, %s97
      %p106 = scmp.eq.s32.totalorder %s21, 1
      %p107 = por %p105, %p106
      %p108 = scmp.ne.s32.totalorder %s97, %s98
      %p109 = scmp.eq.s32.totalorder %s21, 0
      %p110 = por %p108, %p109
      %p111 = scmp.ne.s32.totalorder %s97, %s98
      %p112 = scmp.eq.s32.totalorder %s22, 1
      %p113 = por %p111, %p112
      %p115 = scmp.ne.s32.totalorder %s98, %s114
      %p116 = scmp.eq.s32.totalorder %s22, 0
      %p117 = por %p115, %p116
      %p118 = scmp.le.s32.totalorder 1, %s16
      %p119 = scmp.lt.s32.totalorder %s16, 3
      %p120 = pnand %p118, %p119
      %p121 = pneg %p120
      // Predicated region
      $region9: #{tpu_custom_call.1} parent=5 // pred_check
        _
      $region10: #{tpu_custom_call.1} parent=5 // pred_check_branch
        %123 = sbr.rel (%p120) target = $region12
      $region11: #{tpu_custom_call.1} parent=5 // pred_region
        %s124 = ssub.s32 %s16, 1
        // Predicated region
        $region13: #{tpu_custom_call.1} parent=11 // pred_check
          %p125 = pneg %p63
        $region14: #{tpu_custom_call.1} parent=11 // pred_check_branch
          %127 = sbr.rel (%p125) target = $region16
        $region15: #{tpu_custom_call.1} parent=11 // pred_region
          %s129 = ssub.s32 8192, 8192
          %130 = vsyncadd [#allocation6], %s129
          %s131 = sshll.u32 [#allocation5], 4
          %s132 = int_to_ptr.vmem [resolvable:$true] %s131
          %137 = dma.hbm_to_vmem [thread:$0]  %s1, 8192, %s132, [#allocation6], 256, 256, 16
        $region16: #{tpu_custom_call.1} parent=11 // pred_fallthru
          _
        // Predicated region
        $region17: #{tpu_custom_call.1} parent=11 // pred_check
          %p138 = pneg %p84
        $region18: #{tpu_custom_call.1} parent=11 // pred_check_branch
          %140 = sbr.rel (%p138) target = $region20
        $region19: #{tpu_custom_call.1} parent=11 // pred_region
          %s142 = ssub.s32 64, 64
          %143 = vsyncadd [#allocation6], %s142
          %s145 = sshll.u32 [#allocation7], 4
          %s146 = int_to_ptr.vmem [resolvable:$true] %s145
          %148 = dma.hbm_to_vmem [thread:$0]  %s2, 64, %s146, [#allocation6]
        $region20: #{tpu_custom_call.1} parent=11 // pred_fallthru
          _
      $region12: #{tpu_custom_call.1} parent=5 // pred_fallthru
        _
      %p149 = scmp.lt.s32.totalorder %s16, 2
      // Predicated region
      $region21: #{tpu_custom_call.1} parent=5 // pred_check
        %p150 = pneg %p149
      $region22: #{tpu_custom_call.1} parent=5 // pred_check_branch
        %152 = sbr.rel (%p150) target = $region24
      $region23: #{tpu_custom_call.1} parent=5 // pred_region
        // Predicated region
        $region25: #{tpu_custom_call.1} parent=23 // pred_check
          %p153 = pneg %p36
        $region26: #{tpu_custom_call.1} parent=23 // pred_check_branch
          %155 = sbr.rel (%p153) target = $region28
        $region27: #{tpu_custom_call.1} parent=23 // pred_region
          %s156 = sand.u32 %s26, 1
          %s157 = scalar_lea.sflag [#allocation3], %s156
          %s158 = sand.u32 %s26, 1
          %s159 = smul.addr %s158, 320
          %s160 = scalar_lea.vmem [#allocation2], %s159
          %s161 = smul.u32 20, %s16
          %s162 = ssub.s32 38, %s161
          %p163 = scmp.lt.s32.totalorder %s162, 20
          %s164 = scalar_select %p163, %s162, 20
          %s165 = smul.u32 128, %s164
          %s166 = smul.u32 %s165, 2
          %s168 = ssub.s32 5120, %s166
          %169 = vsyncadd %s157, %s168
          %p170 = scmp.ne.s32.totalorder 0, %s166
          %s171 = smul.addr %s161, 2
          %s172 = smul.addr %s171, 128
          %s173 = scalar_lea.hbm %s0, %s172
          %s174 = smul.u32 16, %s164
          %s175 = sshll.u32 %s160, 4
          %s176 = int_to_ptr.vmem [resolvable:$true] %s175
          %s177 = sshll.u32 %s174, 4
          %181 = dma.hbm_to_vmem [thread:$0]  (%p170), %s173, %s177, %s176, %s157, 256, 256, 16
        $region28: #{tpu_custom_call.1} parent=23 // pred_fallthru
          _
      $region24: #{tpu_custom_call.1} parent=5 // pred_fallthru
        _
      %p182 = scmp.le.s32.totalorder 1, %s16
      %p183 = scmp.lt.s32.totalorder %s16, 3
      %p184 = pnand %p182, %p183
      %p185 = pneg %p184
      // Predicated region
      $region29: #{tpu_custom_call.1} parent=5 // pred_check
        _
      $region30: #{tpu_custom_call.1} parent=5 // pred_check_branch
        %187 = sbr.rel (%p184) target = $region32
      $region31: #{tpu_custom_call.1} parent=5 // pred_region
        %s188 = ssub.s32 %s16, 1
        %s189 = sand.u32 %s29, 1
        %s190 = scalar_lea.sflag [#allocation3], %s189
        %s191 = sand.u32 %s29, 1
        %s192 = smul.addr %s191, 320
        %s193 = scalar_lea.vmem [#allocation2], %s192
        // Predicated region
        $region33: #{tpu_custom_call.1} parent=31 // pred_check
          %p194 = pneg %p42
        $region34: #{tpu_custom_call.1} parent=31 // pred_check_branch
          %196 = sbr.rel (%p194) target = $region36
        $region35: #{tpu_custom_call.1} parent=31 // pred_region
          %197 = dma.done %s190, 5120
        $region36: #{tpu_custom_call.1} parent=31 // pred_fallthru
          _
        // Predicated region
        $region37: #{tpu_custom_call.1} parent=31 // pred_check
          %p198 = pneg %p63
        $region38: #{tpu_custom_call.1} parent=31 // pred_check_branch
          %200 = sbr.rel (%p198) target = $region40
        $region39: #{tpu_custom_call.1} parent=31 // pred_region
          %201 = dma.done [#allocation6], 8192
        $region40: #{tpu_custom_call.1} parent=31 // pred_fallthru
          _
        // Predicated region
        $region41: #{tpu_custom_call.1} parent=31 // pred_check
          %p202 = pneg %p84
        $region42: #{tpu_custom_call.1} parent=31 // pred_check_branch
          %204 = sbr.rel (%p202) target = $region44
        $region43: #{tpu_custom_call.1} parent=31 // pred_region
          %205 = dma.done [#allocation6], 64
        $region44: #{tpu_custom_call.1} parent=31 // pred_fallthru
          _
        %s206 = sand.u32 %s29, 1
        %s207 = scalar_lea.sflag [#allocation3], %s206
        %s208 = sand.u32 %s29, 1
        %s209 = smul.addr %s208, 320
        %s210 = scalar_lea.vmem [#allocation2], %s209
        %p211 = pneg %p42
        %p212 = pneg %p39
        %p213 = pneg %p63
        %p214 = pneg %p60
        %p215 = pneg %p84
        %p216 = pneg %p81
        %p217 = pneg %p110
        %p218 = pneg %p107
        %s219 = sand.u32 %s97, 1
        %s220 = scalar_lea.sflag [#allocation4], %s219
        %s221 = sand.u32 %s97, 1
        %s222 = smul.addr %s221, 640
        %s223 = scalar_lea.vmem [#allocation8], %s222
        %s224 = smul.u32 20, %s21
        %s225 = ssub.s32 38, %s224
        %p226 = scmp.lt.s32.totalorder %s225, 20
        %s227 = scalar_select %p226, %s225, 20
        %s228 = smul.u32 128, %s227
        %s229 = smul.u32 %s228, 2
        %s230 = smul.u32 20, %s21
        %s231 = ssub.s32 38, %s230
        %p232 = scmp.lt.s32.totalorder %s231, 20
        %s233 = scalar_select %p232, %s231, 20
        %s234 = smul.u32 128, %s233
        %s235 = smul.u32 %s234, 4
        %v236 = vld [vmem:[%s193] sm:$0xff]
        %v237 = vld [vmem:[%s193 + $0x8] sm:$0xff]
        %v238 = vld [vmem:[%s193 + $0x10] sm:$0xff]
        %v239 = vld [vmem:[%s193 + $0x18] sm:$0xff]
        %v240 = vld [vmem:[%s193 + $0x20] sm:$0xff]
        %v241 = vld [vmem:[%s193 + $0x28] sm:$0xff]
        %v242 = vld [vmem:[%s193 + $0x30] sm:$0xff]
        %v243 = vld [vmem:[%s193 + $0x38] sm:$0xff]
        %v244 = vld [vmem:[%s193 + $0x40] sm:$0xff]
        %v245 = vld [vmem:[%s193 + $0x48] sm:$0xff]
        %v246 = vld [vmem:[%s193 + $0x50] sm:$0xff]
        %v247 = vld [vmem:[%s193 + $0x58] sm:$0xff]
        %v248 = vld [vmem:[%s193 + $0x60] sm:$0xff]
        %v249 = vld [vmem:[%s193 + $0x68] sm:$0xff]
        %v250 = vld [vmem:[%s193 + $0x70] sm:$0xff]
        %v251 = vld [vmem:[%s193 + $0x78] sm:$0xff]
        %v252 = vld [vmem:[%s193 + $0x80] sm:$0xff]
        %v253 = vld [vmem:[%s193 + $0x88] sm:$0xff]
        %v254 = vld [vmem:[%s193 + $0x90] sm:$0xff]
        %v255 = vld [vmem:[%s193 + $0x98] sm:$0xff]
        %v256 = vld [vmem:[%s193 + $0xa0] sm:$0xff]
        %v257 = vld [vmem:[%s193 + $0xa8] sm:$0xff]
        %v258 = vld [vmem:[%s193 + $0xb0] sm:$0xff]
        %v259 = vld [vmem:[%s193 + $0xb8] sm:$0xff]
        %v260 = vld [vmem:[%s193 + $0xc0] sm:$0xff]
        %v261 = vld [vmem:[%s193 + $0xc8] sm:$0xff]
        %v262 = vld [vmem:[%s193 + $0xd0] sm:$0xff]
        %v263 = vld [vmem:[%s193 + $0xd8] sm:$0xff]
        %v264 = vld [vmem:[%s193 + $0xe0] sm:$0xff]
        %v265 = vld [vmem:[%s193 + $0xe8] sm:$0xff]
        %v266 = vld [vmem:[%s193 + $0xf0] sm:$0xff]
        %v267 = vld [vmem:[%s193 + $0xf8] sm:$0xff]
        %v268 = vld [vmem:[%s193 + $0x100] sm:$0xff]
        %v269 = vld [vmem:[%s193 + $0x108] sm:$0xff]
        %v270 = vld [vmem:[%s193 + $0x110] sm:$0xff]
        %v271 = vld [vmem:[%s193 + $0x118] sm:$0xff]
        %v272 = vld [vmem:[%s193 + $0x120] sm:$0xff]
        %v273 = vld [vmem:[%s193 + $0x128] sm:$0xff]
        %v274 = vld [vmem:[%s193 + $0x130] sm:$0xff]
        %v275 = vld [vmem:[%s193 + $0x138] sm:$0xff]
        %v276 = vpack.c.bf16 %v238, %v236
        %v277 = vpack.c.bf16 %v239, %v237
        %v278 = vpack.c.bf16 %v242, %v240
        %v279 = vpack.c.bf16 %v243, %v241
        %v280 = vpack.c.bf16 %v246, %v244
        %v281 = vpack.c.bf16 %v247, %v245
        %v282 = vpack.c.bf16 %v250, %v248
        %v283 = vpack.c.bf16 %v251, %v249
        %v284 = vpack.c.bf16 %v254, %v252
        %v285 = vpack.c.bf16 %v255, %v253
        %v286 = vpack.c.bf16 %v258, %v256
        %v287 = vpack.c.bf16 %v259, %v257
        %v288 = vpack.c.bf16 %v262, %v260
        %v289 = vpack.c.bf16 %v263, %v261
        %v290 = vpack.c.bf16 %v266, %v264
        %v291 = vpack.c.bf16 %v267, %v265
        %v292 = vpack.c.bf16 %v270, %v268
        %v293 = vpack.c.bf16 %v271, %v269
        %v294 = vpack.c.bf16 %v274, %v272
        %v295 = vpack.c.bf16 %v275, %v273
        %v296 = vld [vmem:[#allocation5] sm:$0xff]
        %v297 = vld [vmem:[#allocation5 + $0x8] sm:$0xff]
        %v298 = vld [vmem:[#allocation5 + $0x10] sm:$0xff]
        %v299 = vld [vmem:[#allocation5 + $0x18] sm:$0xff]
        %v300 = vld [vmem:[#allocation5 + $0x20] sm:$0xff]
        %v301 = vld [vmem:[#allocation5 + $0x28] sm:$0xff]
        %v302 = vld [vmem:[#allocation5 + $0x30] sm:$0xff]
        %v303 = vld [vmem:[#allocation5 + $0x38] sm:$0xff]
        %v304 = vld [vmem:[#allocation5 + $0x40] sm:$0xff]
        %v305 = vld [vmem:[#allocation5 + $0x48] sm:$0xff]
        %v306 = vld [vmem:[#allocation5 + $0x50] sm:$0xff]
        %v307 = vld [vmem:[#allocation5 + $0x58] sm:$0xff]
        %v308 = vld [vmem:[#allocation5 + $0x60] sm:$0xff]
        %v309 = vld [vmem:[#allocation5 + $0x68] sm:$0xff]
        %v310 = vld [vmem:[#allocation5 + $0x70] sm:$0xff]
        %v311 = vld [vmem:[#allocation5 + $0x78] sm:$0xff]
        %v312 = vld [vmem:[#allocation5 + $0x80] sm:$0xff]
        %v313 = vld [vmem:[#allocation5 + $0x88] sm:$0xff]
        %v314 = vld [vmem:[#allocation5 + $0x90] sm:$0xff]
        %v315 = vld [vmem:[#allocation5 + $0x98] sm:$0xff]
        %v316 = vld [vmem:[#allocation5 + $0xa0] sm:$0xff]
        %v317 = vld [vmem:[#allocation5 + $0xa8] sm:$0xff]
        %v318 = vld [vmem:[#allocation5 + $0xb0] sm:$0xff]
        %v319 = vld [vmem:[#allocation5 + $0xb8] sm:$0xff]
        %v320 = vld [vmem:[#allocation5 + $0xc0] sm:$0xff]
        %v321 = vld [vmem:[#allocation5 + $0xc8] sm:$0xff]
        %v322 = vld [vmem:[#allocation5 + $0xd0] sm:$0xff]
        %v323 = vld [vmem:[#allocation5 + $0xd8] sm:$0xff]
        %v324 = vld [vmem:[#allocation5 + $0xe0] sm:$0xff]
        %v325 = vld [vmem:[#allocation5 + $0xe8] sm:$0xff]
        %v326 = vld [vmem:[#allocation5 + $0xf0] sm:$0xff]
        %v327 = vld [vmem:[#allocation5 + $0xf8] sm:$0xff]
        %v328 = vld [vmem:[#allocation5 + $0x100] sm:$0xff]
        %v329 = vld [vmem:[#allocation5 + $0x108] sm:$0xff]
        %v330 = vld [vmem:[#allocation5 + $0x110] sm:$0xff]
        %v331 = vld [vmem:[#allocation5 + $0x118] sm:$0xff]
        %v332 = vld [vmem:[#allocation5 + $0x120] sm:$0xff]
        %v333 = vld [vmem:[#allocation5 + $0x128] sm:$0xff]
        %v334 = vld [vmem:[#allocation5 + $0x130] sm:$0xff]
        %v335 = vld [vmem:[#allocation5 + $0x138] sm:$0xff]
        %v336 = vld [vmem:[#allocation5 + $0x140] sm:$0xff]
        %v337 = vld [vmem:[#allocation5 + $0x148] sm:$0xff]
        %v338 = vld [vmem:[#allocation5 + $0x150] sm:$0xff]
        %v339 = vld [vmem:[#allocation5 + $0x158] sm:$0xff]
        %v340 = vld [vmem:[#allocation5 + $0x160] sm:$0xff]
        %v341 = vld [vmem:[#allocation5 + $0x168] sm:$0xff]
        %v342 = vld [vmem:[#allocation5 + $0x170] sm:$0xff]
        %v343 = vld [vmem:[#allocation5 + $0x178] sm:$0xff]
        %v344 = vld [vmem:[#allocation5 + $0x180] sm:$0xff]
        %v345 = vld [vmem:[#allocation5 + $0x188] sm:$0xff]
        %v346 = vld [vmem:[#allocation5 + $0x190] sm:$0xff]
        %v347 = vld [vmem:[#allocation5 + $0x198] sm:$0xff]
        %v348 = vld [vmem:[#allocation5 + $0x1a0] sm:$0xff]
        %v349 = vld [vmem:[#allocation5 + $0x1a8] sm:$0xff]
        %v350 = vld [vmem:[#allocation5 + $0x1b0] sm:$0xff]
        %v351 = vld [vmem:[#allocation5 + $0x1b8] sm:$0xff]
        %v352 = vld [vmem:[#allocation5 + $0x1c0] sm:$0xff]
        %v353 = vld [vmem:[#allocation5 + $0x1c8] sm:$0xff]
        %v354 = vld [vmem:[#allocation5 + $0x1d0] sm:$0xff]
        %v355 = vld [vmem:[#allocation5 + $0x1d8] sm:$0xff]
        %v356 = vld [vmem:[#allocation5 + $0x1e0] sm:$0xff]
        %v357 = vld [vmem:[#allocation5 + $0x1e8] sm:$0xff]
        %v358 = vld [vmem:[#allocation5 + $0x1f0] sm:$0xff]
        %v359 = vld [vmem:[#allocation5 + $0x1f8] sm:$0xff]
        %v360 = vld [vmem:[#allocation7] sm:$0xf]
        %v362 = vlaneseq
        %v363 = vshrl.u32 %v362, 7
        %v364 = vsub.s32 0, %v363
        %v365 = vrot.slane %v360, %v364
        %v366 = vlaneseq
        %v367 = vshrl.u32 %v366, 7
        %v368 = vsub.s32 1, %v367
        %v369 = vrot.slane %v360, %v368
        %v370 = vlaneseq
        %v371 = vshrl.u32 %v370, 7
        %v372 = vsub.s32 2, %v371
        %v373 = vrot.slane %v360, %v372
        %v374 = vlaneseq
        %v375 = vshrl.u32 %v374, 7
        %v376 = vsub.s32 3, %v375
        %v377 = vrot.slane %v360, %v376
        %v446 = vunpack.c.l.b16 %v296
        %v447 = vunpack.c.h.b16 %v296
        %v448 = vunpack.c.l.b16 %v297
        %v449 = vunpack.c.h.b16 %v297
        %v450 = vunpack.c.l.b16 %v298
        %v451 = vunpack.c.h.b16 %v298
        %v452 = vunpack.c.l.b16 %v299
        %v453 = vunpack.c.h.b16 %v299
        %v454 = vunpack.c.l.b16 %v300
        %v455 = vunpack.c.h.b16 %v300
        %v456 = vunpack.c.l.b16 %v301
        %v457 = vunpack.c.h.b16 %v301
        %v458 = vunpack.c.l.b16 %v302
        %v459 = vunpack.c.h.b16 %v302
        %v460 = vunpack.c.l.b16 %v303
        %v461 = vunpack.c.h.b16 %v303
        %v462 = vunpack.c.l.b16 %v304
        %v463 = vunpack.c.h.b16 %v304
        %v464 = vunpack.c.l.b16 %v305
        %v465 = vunpack.c.h.b16 %v305
        %v466 = vunpack.c.l.b16 %v306
        %v467 = vunpack.c.h.b16 %v306
        %v468 = vunpack.c.l.b16 %v307
        %v469 = vunpack.c.h.b16 %v307
        %v470 = vunpack.c.l.b16 %v308
        %v471 = vunpack.c.h.b16 %v308
        %v472 = vunpack.c.l.b16 %v309
        %v473 = vunpack.c.h.b16 %v309
        %v474 = vunpack.c.l.b16 %v310
        %v475 = vunpack.c.h.b16 %v310
        %v476 = vunpack.c.l.b16 %v311
        %v477 = vunpack.c.h.b16 %v311
        %v478 = vunpack.c.l.b16 %v312
        %v479 = vunpack.c.h.b16 %v312
        %v480 = vunpack.c.l.b16 %v313
        %v481 = vunpack.c.h.b16 %v313
        %v482 = vunpack.c.l.b16 %v314
        %v483 = vunpack.c.h.b16 %v314
        %v484 = vunpack.c.l.b16 %v315
        %v485 = vunpack.c.h.b16 %v315
        %v486 = vunpack.c.l.b16 %v316
        %v487 = vunpack.c.h.b16 %v316
        %v488 = vunpack.c.l.b16 %v317
        %v489 = vunpack.c.h.b16 %v317
        %v490 = vunpack.c.l.b16 %v318
        %v491 = vunpack.c.h.b16 %v318
        %v492 = vunpack.c.l.b16 %v319
        %v493 = vunpack.c.h.b16 %v319
        %v494 = vunpack.c.l.b16 %v320
        %v495 = vunpack.c.h.b16 %v320
        %v496 = vunpack.c.l.b16 %v321
        %v497 = vunpack.c.h.b16 %v321
        %v498 = vunpack.c.l.b16 %v322
        %v499 = vunpack.c.h.b16 %v322
        %v500 = vunpack.c.l.b16 %v323
        %v501 = vunpack.c.h.b16 %v323
        %v502 = vunpack.c.l.b16 %v324
        %v503 = vunpack.c.h.b16 %v324
        %v504 = vunpack.c.l.b16 %v325
        %v505 = vunpack.c.h.b16 %v325
        %v506 = vunpack.c.l.b16 %v326
        %v507 = vunpack.c.h.b16 %v326
        %v508 = vunpack.c.l.b16 %v327
        %v509 = vunpack.c.h.b16 %v327
        %v510 = vunpack.c.l.b16 %v328
        %v511 = vunpack.c.h.b16 %v328
        %v512 = vunpack.c.l.b16 %v329
        %v513 = vunpack.c.h.b16 %v329
        %v514 = vunpack.c.l.b16 %v330
        %v515 = vunpack.c.h.b16 %v330
        %v516 = vunpack.c.l.b16 %v331
        %v517 = vunpack.c.h.b16 %v331
        %v518 = vunpack.c.l.b16 %v332
        %v519 = vunpack.c.h.b16 %v332
        %v520 = vunpack.c.l.b16 %v333
        %v521 = vunpack.c.h.b16 %v333
        %v522 = vunpack.c.l.b16 %v334
        %v523 = vunpack.c.h.b16 %v334
        %v524 = vunpack.c.l.b16 %v335
        %v525 = vunpack.c.h.b16 %v335
        %v526 = vunpack.c.l.b16 %v336
        %v527 = vunpack.c.h.b16 %v336
        %v528 = vunpack.c.l.b16 %v337
        %v529 = vunpack.c.h.b16 %v337
        %v530 = vunpack.c.l.b16 %v338
        %v531 = vunpack.c.h.b16 %v338
        %v532 = vunpack.c.l.b16 %v339
        %v533 = vunpack.c.h.b16 %v339
        %v534 = vunpack.c.l.b16 %v340
        %v535 = vunpack.c.h.b16 %v340
        %v536 = vunpack.c.l.b16 %v341
        %v537 = vunpack.c.h.b16 %v341
        %v538 = vunpack.c.l.b16 %v342
        %v539 = vunpack.c.h.b16 %v342
        %v540 = vunpack.c.l.b16 %v343
        %v541 = vunpack.c.h.b16 %v343
        %v542 = vunpack.c.l.b16 %v344
        %v543 = vunpack.c.h.b16 %v344
        %v544 = vunpack.c.l.b16 %v345
        %v545 = vunpack.c.h.b16 %v345
        %v546 = vunpack.c.l.b16 %v346
        %v547 = vunpack.c.h.b16 %v346
        %v548 = vunpack.c.l.b16 %v347
        %v549 = vunpack.c.h.b16 %v347
        %v550 = vunpack.c.l.b16 %v348
        %v551 = vunpack.c.h.b16 %v348
        %v552 = vunpack.c.l.b16 %v349
        %v553 = vunpack.c.h.b16 %v349
        %v554 = vunpack.c.l.b16 %v350
        %v555 = vunpack.c.h.b16 %v350
        %v556 = vunpack.c.l.b16 %v351
        %v557 = vunpack.c.h.b16 %v351
        %v558 = vunpack.c.l.b16 %v352
        %v559 = vunpack.c.h.b16 %v352
        %v560 = vunpack.c.l.b16 %v353
        %v561 = vunpack.c.h.b16 %v353
        %v562 = vunpack.c.l.b16 %v354
        %v563 = vunpack.c.h.b16 %v354
        %v564 = vunpack.c.l.b16 %v355
        %v565 = vunpack.c.h.b16 %v355
        %v566 = vunpack.c.l.b16 %v356
        %v567 = vunpack.c.h.b16 %v356
        %v568 = vunpack.c.l.b16 %v357
        %v569 = vunpack.c.h.b16 %v357
        %v570 = vunpack.c.l.b16 %v358
        %v571 = vunpack.c.h.b16 %v358
        %v572 = vunpack.c.l.b16 %v359
        %v573 = vunpack.c.h.b16 %v359
        %v574 = vpack.c.b16 %v450, %v446
        %v575 = vpack.c.b16 %v451, %v447
        %v576 = vpack.c.b16 %v452, %v448
        %v577 = vpack.c.b16 %v453, %v449
        %v578 = vpack.c.b16 %v458, %v454
        %v579 = vpack.c.b16 %v459, %v455
        %v580 = vpack.c.b16 %v460, %v456
        %v581 = vpack.c.b16 %v461, %v457
        %v582 = vpack.c.b16 %v466, %v462
        %v583 = vpack.c.b16 %v467, %v463
        %v584 = vpack.c.b16 %v468, %v464
        %v585 = vpack.c.b16 %v469, %v465
        %v586 = vpack.c.b16 %v474, %v470
        %v587 = vpack.c.b16 %v475, %v471
        %v588 = vpack.c.b16 %v476, %v472
        %v589 = vpack.c.b16 %v477, %v473
        %v590 = vpack.c.b16 %v482, %v478
        %v591 = vpack.c.b16 %v483, %v479
        %v592 = vpack.c.b16 %v484, %v480
        %v593 = vpack.c.b16 %v485, %v481
        %v594 = vpack.c.b16 %v490, %v486
        %v595 = vpack.c.b16 %v491, %v487
        %v596 = vpack.c.b16 %v492, %v488
        %v597 = vpack.c.b16 %v493, %v489
        %v598 = vpack.c.b16 %v498, %v494
        %v599 = vpack.c.b16 %v499, %v495
        %v600 = vpack.c.b16 %v500, %v496
        %v601 = vpack.c.b16 %v501, %v497
        %v602 = vpack.c.b16 %v506, %v502
        %v603 = vpack.c.b16 %v507, %v503
        %v604 = vpack.c.b16 %v508, %v504
        %v605 = vpack.c.b16 %v509, %v505
        %v606 = vpack.c.b16 %v514, %v510
        %v607 = vpack.c.b16 %v515, %v511
        %v608 = vpack.c.b16 %v516, %v512
        %v609 = vpack.c.b16 %v517, %v513
        %v610 = vpack.c.b16 %v522, %v518
        %v611 = vpack.c.b16 %v523, %v519
        %v612 = vpack.c.b16 %v524, %v520
        %v613 = vpack.c.b16 %v525, %v521
        %v614 = vpack.c.b16 %v530, %v526
        %v615 = vpack.c.b16 %v531, %v527
        %v616 = vpack.c.b16 %v532, %v528
        %v617 = vpack.c.b16 %v533, %v529
        %v618 = vpack.c.b16 %v538, %v534
        %v619 = vpack.c.b16 %v539, %v535
        %v620 = vpack.c.b16 %v540, %v536
        %v621 = vpack.c.b16 %v541, %v537
        %v622 = vpack.c.b16 %v546, %v542
        %v623 = vpack.c.b16 %v547, %v543
        %v624 = vpack.c.b16 %v548, %v544
        %v625 = vpack.c.b16 %v549, %v545
        %v626 = vpack.c.b16 %v554, %v550
        %v627 = vpack.c.b16 %v555, %v551
        %v628 = vpack.c.b16 %v556, %v552
        %v629 = vpack.c.b16 %v557, %v553
        %v630 = vpack.c.b16 %v562, %v558
        %v631 = vpack.c.b16 %v563, %v559
        %v632 = vpack.c.b16 %v564, %v560
        %v633 = vpack.c.b16 %v565, %v561
        %v634 = vpack.c.b16 %v570, %v566
        %v635 = vpack.c.b16 %v571, %v567
        %v636 = vpack.c.b16 %v572, %v568
        %v637 = vpack.c.b16 %v573, %v569
        %702 = vmatprep.subr.bf16.mxu0 %v603
        %703 = vmatpush1.bf16.msra.mxu0 %v602
        %704 = vmatprep.subr.bf16.mxu0 %v599
        %705 = vmatpush1.bf16.msra.mxu0 %v598
        %706 = vmatprep.subr.bf16.mxu0 %v595
        %707 = vmatpush1.bf16.msra.mxu0 %v594
        %708 = vmatprep.subr.bf16.mxu0 %v591
        %709 = vmatpush1.bf16.msra.mxu0 %v590
        %710 = vmatprep.subr.bf16.mxu0 %v587
        %711 = vmatpush1.bf16.msra.mxu0 %v586
        %712 = vmatprep.subr.bf16.mxu0 %v583
        %713 = vmatpush1.bf16.msra.mxu0 %v582
        %714 = vmatprep.subr.bf16.mxu0 %v579
        %715 = vmatpush1.bf16.msra.mxu0 %v578
        %716 = vmatprep.subr.bf16.mxu0 %v575
        %717 = vmatpush1.bf16.msra.mxu0 %v574
        %718 = vmatprep.subr.bf16.mxu0 %v635
        %719 = vmatpush2.bf16.msra.mxu0 %v634
        %720 = vmatprep.subr.bf16.mxu0 %v631
        %721 = vmatpush2.bf16.msra.mxu0 %v630
        %722 = vmatprep.subr.bf16.mxu0 %v627
        %723 = vmatpush2.bf16.msra.mxu0 %v626
        %724 = vmatprep.subr.bf16.mxu0 %v623
        %725 = vmatpush2.bf16.msra.mxu0 %v622
        %726 = vmatprep.subr.bf16.mxu0 %v619
        %727 = vmatpush2.bf16.msra.mxu0 %v618
        %728 = vmatprep.subr.bf16.mxu0 %v615
        %729 = vmatpush2.bf16.msra.mxu0 %v614
        %730 = vmatprep.subr.bf16.mxu0 %v611
        %731 = vmatpush2.bf16.msra.mxu0 %v610
        %732 = vmatprep.subr.bf16.mxu0 %v607
        %733 = vmatpush2.bf16.msra.mxu0 %v606
        %734 = vmatprep.mubr.bf16.mxu0 %v277
        %735 = vmatmul.mubr.bf16.gmra.mxu0 %v276
        %v736 = vpop.f32.mrf.mxu0
        %v737 = vadd.f32 %v365, %v736
        %v738 = vpop.f32.mrf.mxu0
        %v739 = vadd.f32 %v369, %v738
        %v740 = vpop.f32.mrf.mxu0
        %v741 = vadd.f32 %v365, %v740
        %v742 = vpop.f32.mrf.mxu0
        %v743 = vadd.f32 %v369, %v742
        %744 = vmatprep.mubr.bf16.mxu0 %v279
        %745 = vmatmul.mubr.bf16.gmra.mxu0 %v278
        %v746 = vpop.f32.mrf.mxu0
        %v747 = vadd.f32 %v365, %v746
        %v748 = vpop.f32.mrf.mxu0
        %v749 = vadd.f32 %v369, %v748
        %v750 = vpop.f32.mrf.mxu0
        %v751 = vadd.f32 %v365, %v750
        %v752 = vpop.f32.mrf.mxu0
        %v753 = vadd.f32 %v369, %v752
        %754 = vmatprep.mubr.bf16.mxu0 %v281
        %755 = vmatmul.mubr.bf16.gmra.mxu0 %v280
        %v756 = vpop.f32.mrf.mxu0
        %v757 = vadd.f32 %v365, %v756
        %v758 = vpop.f32.mrf.mxu0
        %v759 = vadd.f32 %v369, %v758
        %v760 = vpop.f32.mrf.mxu0
        %v761 = vadd.f32 %v365, %v760
        %v762 = vpop.f32.mrf.mxu0
        %v763 = vadd.f32 %v369, %v762
        %764 = vmatprep.mubr.bf16.mxu0 %v283
        %765 = vmatmul.mubr.bf16.gmra.mxu0 %v282
        %v766 = vpop.f32.mrf.mxu0
        %v767 = vadd.f32 %v365, %v766
        %v768 = vpop.f32.mrf.mxu0
        %v769 = vadd.f32 %v369, %v768
        %v770 = vpop.f32.mrf.mxu0
        %v771 = vadd.f32 %v365, %v770
        %v772 = vpop.f32.mrf.mxu0
        %v773 = vadd.f32 %v369, %v772
        %774 = vmatprep.mubr.bf16.mxu0 %v285
        %775 = vmatmul.mubr.bf16.gmra.mxu0 %v284
        %v776 = vpop.f32.mrf.mxu0
        %v777 = vadd.f32 %v365, %v776
        %v778 = vpop.f32.mrf.mxu0
        %v779 = vadd.f32 %v369, %v778
        %v780 = vpop.f32.mrf.mxu0
        %v781 = vadd.f32 %v365, %v780
        %v782 = vpop.f32.mrf.mxu0
        %v783 = vadd.f32 %v369, %v782
        %784 = vmatprep.mubr.bf16.mxu0 %v287
        %785 = vmatmul.mubr.bf16.gmra.mxu0 %v286
        %v786 = vpop.f32.mrf.mxu0
        %v787 = vadd.f32 %v365, %v786
        %v788 = vpop.f32.mrf.mxu0
        %v789 = vadd.f32 %v369, %v788
        %v790 = vpop.f32.mrf.mxu0
        %v791 = vadd.f32 %v365, %v790
        %v792 = vpop.f32.mrf.mxu0
        %v793 = vadd.f32 %v369, %v792
        %794 = vmatprep.mubr.bf16.mxu0 %v289
        %795 = vmatmul.mubr.bf16.gmra.mxu0 %v288
        %v796 = vpop.f32.mrf.mxu0
        %v797 = vadd.f32 %v365, %v796
        %v798 = vpop.f32.mrf.mxu0
        %v799 = vadd.f32 %v369, %v798
        %v800 = vpop.f32.mrf.mxu0
        %v801 = vadd.f32 %v365, %v800
        %v802 = vpop.f32.mrf.mxu0
        %v803 = vadd.f32 %v369, %v802
        %804 = vmatprep.mubr.bf16.mxu0 %v291
        %805 = vmatmul.mubr.bf16.gmra.mxu0 %v290
        %v806 = vpop.f32.mrf.mxu0
        %v807 = vadd.f32 %v365, %v806
        %v808 = vpop.f32.mrf.mxu0
        %v809 = vadd.f32 %v369, %v808
        %v810 = vpop.f32.mrf.mxu0
        %v811 = vadd.f32 %v365, %v810
        %v812 = vpop.f32.mrf.mxu0
        %v813 = vadd.f32 %v369, %v812
        %814 = vmatprep.mubr.bf16.mxu0 %v293
        %815 = vmatmul.mubr.bf16.gmra.mxu0 %v292
        %v816 = vpop.f32.mrf.mxu0
        %v817 = vadd.f32 %v365, %v816
        %v818 = vpop.f32.mrf.mxu0
        %v819 = vadd.f32 %v369, %v818
        %v820 = vpop.f32.mrf.mxu0
        %v821 = vadd.f32 %v365, %v820
        %v822 = vpop.f32.mrf.mxu0
        %v823 = vadd.f32 %v369, %v822
        %824 = vmatprep.mubr.bf16.mxu0 %v295
        %825 = vmatmul.mubr.bf16.gmra.mxu0 %v294
        %v826 = vpop.f32.mrf.mxu0
        %v827 = vadd.f32 %v365, %v826
        %v828 = vpop.f32.mrf.mxu0
        %v829 = vadd.f32 %v369, %v828
        %v830 = vpop.f32.mrf.mxu0
        %v831 = vadd.f32 %v365, %v830
        %v832 = vpop.f32.mrf.mxu0
        %v833 = vadd.f32 %v369, %v832
        %834 = vdwg.mxu0
        %835 = vmatprep.subr.bf16.mxu0 %v605
        %836 = vmatpush1.bf16.msra.mxu0 %v604
        %837 = vmatprep.subr.bf16.mxu0 %v601
        %838 = vmatpush1.bf16.msra.mxu0 %v600
        %839 = vmatprep.subr.bf16.mxu0 %v597
        %840 = vmatpush1.bf16.msra.mxu0 %v596
        %841 = vmatprep.subr.bf16.mxu0 %v593
        %842 = vmatpush1.bf16.msra.mxu0 %v592
        %843 = vmatprep.subr.bf16.mxu0 %v589
        %844 = vmatpush1.bf16.msra.mxu0 %v588
        %845 = vmatprep.subr.bf16.mxu0 %v585
        %846 = vmatpush1.bf16.msra.mxu0 %v584
        %847 = vmatprep.subr.bf16.mxu0 %v581
        %848 = vmatpush1.bf16.msra.mxu0 %v580
        %849 = vmatprep.subr.bf16.mxu0 %v577
        %850 = vmatpush1.bf16.msra.mxu0 %v576
        %851 = vmatprep.subr.bf16.mxu0 %v637
        %852 = vmatpush2.bf16.msra.mxu0 %v636
        %853 = vmatprep.subr.bf16.mxu0 %v633
        %854 = vmatpush2.bf16.msra.mxu0 %v632
        %855 = vmatprep.subr.bf16.mxu0 %v629
        %856 = vmatpush2.bf16.msra.mxu0 %v628
        %857 = vmatprep.subr.bf16.mxu0 %v625
        %858 = vmatpush2.bf16.msra.mxu0 %v624
        %859 = vmatprep.subr.bf16.mxu0 %v621
        %860 = vmatpush2.bf16.msra.mxu0 %v620
        %861 = vmatprep.subr.bf16.mxu0 %v617
        %862 = vmatpush2.bf16.msra.mxu0 %v616
        %863 = vmatprep.subr.bf16.mxu0 %v613
        %864 = vmatpush2.bf16.msra.mxu0 %v612
        %865 = vmatprep.subr.bf16.mxu0 %v609
        %866 = vmatpush2.bf16.msra.mxu0 %v608
        %867 = vmatprep.mubr.bf16.mxu0 %v277
        %868 = vmatmul.mubr.bf16.gmra.mxu0 %v276
        %v869 = vpop.f32.mrf.mxu0
        %v870 = vadd.f32 %v373, %v869
        %v871 = vpop.f32.mrf.mxu0
        %v872 = vadd.f32 %v377, %v871
        %v873 = vpop.f32.mrf.mxu0
        %v874 = vadd.f32 %v373, %v873
        %v875 = vpop.f32.mrf.mxu0
        %v876 = vadd.f32 %v377, %v875
        %877 = vmatprep.mubr.bf16.mxu0 %v279
        %878 = vmatmul.mubr.bf16.gmra.mxu0 %v278
        %v879 = vpop.f32.mrf.mxu0
        %v880 = vadd.f32 %v373, %v879
        %v881 = vpop.f32.mrf.mxu0
        %v882 = vadd.f32 %v377, %v881
        %v883 = vpop.f32.mrf.mxu0
        %v884 = vadd.f32 %v373, %v883
        %v885 = vpop.f32.mrf.mxu0
        %v886 = vadd.f32 %v377, %v885
        %887 = vmatprep.mubr.bf16.mxu0 %v281
        %888 = vmatmul.mubr.bf16.gmra.mxu0 %v280
        %v889 = vpop.f32.mrf.mxu0
        %v890 = vadd.f32 %v373, %v889
        %v891 = vpop.f32.mrf.mxu0
        %v892 = vadd.f32 %v377, %v891
        %v893 = vpop.f32.mrf.mxu0
        %v894 = vadd.f32 %v373, %v893
        %v895 = vpop.f32.mrf.mxu0
        %v896 = vadd.f32 %v377, %v895
        %897 = vmatprep.mubr.bf16.mxu0 %v283
        %898 = vmatmul.mubr.bf16.gmra.mxu0 %v282
        %v899 = vpop.f32.mrf.mxu0
        %v900 = vadd.f32 %v373, %v899
        %v901 = vpop.f32.mrf.mxu0
        %v902 = vadd.f32 %v377, %v901
        %v903 = vpop.f32.mrf.mxu0
        %v904 = vadd.f32 %v373, %v903
        %v905 = vpop.f32.mrf.mxu0
        %v906 = vadd.f32 %v377, %v905
        %907 = vmatprep.mubr.bf16.mxu0 %v285
        %908 = vmatmul.mubr.bf16.gmra.mxu0 %v284
        %v909 = vpop.f32.mrf.mxu0
        %v910 = vadd.f32 %v373, %v909
        %v911 = vpop.f32.mrf.mxu0
        %v912 = vadd.f32 %v377, %v911
        %v913 = vpop.f32.mrf.mxu0
        %v914 = vadd.f32 %v373, %v913
        %v915 = vpop.f32.mrf.mxu0
        %v916 = vadd.f32 %v377, %v915
        %917 = vmatprep.mubr.bf16.mxu0 %v287
        %918 = vmatmul.mubr.bf16.gmra.mxu0 %v286
        %v919 = vpop.f32.mrf.mxu0
        %v920 = vadd.f32 %v373, %v919
        %v921 = vpop.f32.mrf.mxu0
        %v922 = vadd.f32 %v377, %v921
        %v923 = vpop.f32.mrf.mxu0
        %v924 = vadd.f32 %v373, %v923
        %v925 = vpop.f32.mrf.mxu0
        %v926 = vadd.f32 %v377, %v925
        %927 = vmatprep.mubr.bf16.mxu0 %v289
        %928 = vmatmul.mubr.bf16.gmra.mxu0 %v288
        %v929 = vpop.f32.mrf.mxu0
        %v930 = vadd.f32 %v373, %v929
        %v931 = vpop.f32.mrf.mxu0
        %v932 = vadd.f32 %v377, %v931
        %v933 = vpop.f32.mrf.mxu0
        %v934 = vadd.f32 %v373, %v933
        %v935 = vpop.f32.mrf.mxu0
        %v936 = vadd.f32 %v377, %v935
        %937 = vmatprep.mubr.bf16.mxu0 %v291
        %938 = vmatmul.mubr.bf16.gmra.mxu0 %v290
        %v939 = vpop.f32.mrf.mxu0
        %v940 = vadd.f32 %v373, %v939
        %v941 = vpop.f32.mrf.mxu0
        %v942 = vadd.f32 %v377, %v941
        %v943 = vpop.f32.mrf.mxu0
        %v944 = vadd.f32 %v373, %v943
        %v945 = vpop.f32.mrf.mxu0
        %v946 = vadd.f32 %v377, %v945
        %947 = vmatprep.mubr.bf16.mxu0 %v293
        %948 = vmatmul.mubr.bf16.gmra.mxu0 %v292
        %v949 = vpop.f32.mrf.mxu0
        %v950 = vadd.f32 %v373, %v949
        %v951 = vpop.f32.mrf.mxu0
        %v952 = vadd.f32 %v377, %v951
        %v953 = vpop.f32.mrf.mxu0
        %v954 = vadd.f32 %v373, %v953
        %v955 = vpop.f32.mrf.mxu0
        %v956 = vadd.f32 %v377, %v955
        %957 = vmatprep.mubr.bf16.mxu0 %v295
        %958 = vmatmul.mubr.bf16.gmra.mxu0 %v294
        %v959 = vpop.f32.mrf.mxu0
        %v960 = vadd.f32 %v373, %v959
        %v961 = vpop.f32.mrf.mxu0
        %v962 = vadd.f32 %v377, %v961
        %v963 = vpop.f32.mrf.mxu0
        %v964 = vadd.f32 %v373, %v963
        %v965 = vpop.f32.mrf.mxu0
        %v966 = vadd.f32 %v377, %v965
        %967 = vdwg.mxu0
        %968 = vst [vmem:[%s223] sm:$0xff] %v737
        %969 = vst [vmem:[%s223 + $0x8] sm:$0xff] %v739
        %970 = vst [vmem:[%s223 + $0x10] sm:$0xff] %v870
        %971 = vst [vmem:[%s223 + $0x18] sm:$0xff] %v872
        %972 = vst [vmem:[%s223 + $0x20] sm:$0xff] %v741
        %973 = vst [vmem:[%s223 + $0x28] sm:$0xff] %v743
        %974 = vst [vmem:[%s223 + $0x30] sm:$0xff] %v874
        %975 = vst [vmem:[%s223 + $0x38] sm:$0xff] %v876
        %976 = vst [vmem:[%s223 + $0x40] sm:$0xff] %v747
        %977 = vst [vmem:[%s223 + $0x48] sm:$0xff] %v749
        %978 = vst [vmem:[%s223 + $0x50] sm:$0xff] %v880
        %979 = vst [vmem:[%s223 + $0x58] sm:$0xff] %v882
        %980 = vst [vmem:[%s223 + $0x60] sm:$0xff] %v751
        %981 = vst [vmem:[%s223 + $0x68] sm:$0xff] %v753
        %982 = vst [vmem:[%s223 + $0x70] sm:$0xff] %v884
        %983 = vst [vmem:[%s223 + $0x78] sm:$0xff] %v886
        %984 = vst [vmem:[%s223 + $0x80] sm:$0xff] %v757
        %985 = vst [vmem:[%s223 + $0x88] sm:$0xff] %v759
        %986 = vst [vmem:[%s223 + $0x90] sm:$0xff] %v890
        %987 = vst [vmem:[%s223 + $0x98] sm:$0xff] %v892
        %988 = vst [vmem:[%s223 + $0xa0] sm:$0xff] %v761
        %989 = vst [vmem:[%s223 + $0xa8] sm:$0xff] %v763
        %990 = vst [vmem:[%s223 + $0xb0] sm:$0xff] %v894
        %991 = vst [vmem:[%s223 + $0xb8] sm:$0xff] %v896
        %992 = vst [vmem:[%s223 + $0xc0] sm:$0xff] %v767
        %993 = vst [vmem:[%s223 + $0xc8] sm:$0xff] %v769
        %994 = vst [vmem:[%s223 + $0xd0] sm:$0xff] %v900
        %995 = vst [vmem:[%s223 + $0xd8] sm:$0xff] %v902
        %996 = vst [vmem:[%s223 + $0xe0] sm:$0xff] %v771
        %997 = vst [vmem:[%s223 + $0xe8] sm:$0xff] %v773
        %998 = vst [vmem:[%s223 + $0xf0] sm:$0xff] %v904
        %999 = vst [vmem:[%s223 + $0xf8] sm:$0xff] %v906
        %1000 = vst [vmem:[%s223 + $0x100] sm:$0xff] %v777
        %1001 = vst [vmem:[%s223 + $0x108] sm:$0xff] %v779
        %1002 = vst [vmem:[%s223 + $0x110] sm:$0xff] %v910
        %1003 = vst [vmem:[%s223 + $0x118] sm:$0xff] %v912
        %1004 = vst [vmem:[%s223 + $0x120] sm:$0xff] %v781
        %1005 = vst [vmem:[%s223 + $0x128] sm:$0xff] %v783
        %1006 = vst [vmem:[%s223 + $0x130] sm:$0xff] %v914
        %1007 = vst [vmem:[%s223 + $0x138] sm:$0xff] %v916
        %1008 = vst [vmem:[%s223 + $0x140] sm:$0xff] %v787
        %1009 = vst [vmem:[%s223 + $0x148] sm:$0xff] %v789
        %1010 = vst [vmem:[%s223 + $0x150] sm:$0xff] %v920
        %1011 = vst [vmem:[%s223 + $0x158] sm:$0xff] %v922
        %1012 = vst [vmem:[%s223 + $0x160] sm:$0xff] %v791
        %1013 = vst [vmem:[%s223 + $0x168] sm:$0xff] %v793
        %1014 = vst [vmem:[%s223 + $0x170] sm:$0xff] %v924
        %1015 = vst [vmem:[%s223 + $0x178] sm:$0xff] %v926
        %1016 = vst [vmem:[%s223 + $0x180] sm:$0xff] %v797
        %1017 = vst [vmem:[%s223 + $0x188] sm:$0xff] %v799
        %1018 = vst [vmem:[%s223 + $0x190] sm:$0xff] %v930
        %1019 = vst [vmem:[%s223 + $0x198] sm:$0xff] %v932
        %1020 = vst [vmem:[%s223 + $0x1a0] sm:$0xff] %v801
        %1021 = vst [vmem:[%s223 + $0x1a8] sm:$0xff] %v803
        %1022 = vst [vmem:[%s223 + $0x1b0] sm:$0xff] %v934
        %1023 = vst [vmem:[%s223 + $0x1b8] sm:$0xff] %v936
        %1024 = vst [vmem:[%s223 + $0x1c0] sm:$0xff] %v807
        %1025 = vst [vmem:[%s223 + $0x1c8] sm:$0xff] %v809
        %1026 = vst [vmem:[%s223 + $0x1d0] sm:$0xff] %v940
        %1027 = vst [vmem:[%s223 + $0x1d8] sm:$0xff] %v942
        %1028 = vst [vmem:[%s223 + $0x1e0] sm:$0xff] %v811
        %1029 = vst [vmem:[%s223 + $0x1e8] sm:$0xff] %v813
        %1030 = vst [vmem:[%s223 + $0x1f0] sm:$0xff] %v944
        %1031 = vst [vmem:[%s223 + $0x1f8] sm:$0xff] %v946
        %1032 = vst [vmem:[%s223 + $0x200] sm:$0xff] %v817
        %1033 = vst [vmem:[%s223 + $0x208] sm:$0xff] %v819
        %1034 = vst [vmem:[%s223 + $0x210] sm:$0xff] %v950
        %1035 = vst [vmem:[%s223 + $0x218] sm:$0xff] %v952
        %1036 = vst [vmem:[%s223 + $0x220] sm:$0xff] %v821
        %1037 = vst [vmem:[%s223 + $0x228] sm:$0xff] %v823
        %1038 = vst [vmem:[%s223 + $0x230] sm:$0xff] %v954
        %1039 = vst [vmem:[%s223 + $0x238] sm:$0xff] %v956
        %1040 = vst [vmem:[%s223 + $0x240] sm:$0xff] %v827
        %1041 = vst [vmem:[%s223 + $0x248] sm:$0xff] %v829
        %1042 = vst [vmem:[%s223 + $0x250] sm:$0xff] %v960
        %1043 = vst [vmem:[%s223 + $0x258] sm:$0xff] %v962
        %1044 = vst [vmem:[%s223 + $0x260] sm:$0xff] %v831
        %1045 = vst [vmem:[%s223 + $0x268] sm:$0xff] %v833
        %1046 = vst [vmem:[%s223 + $0x270] sm:$0xff] %v964
        %1047 = vst [vmem:[%s223 + $0x278] sm:$0xff] %v966
        %s1048 = sand.u32 %s97, 1
        %s1049 = scalar_lea.sflag [#allocation4], %s1048
        %s1050 = sand.u32 %s97, 1
        %s1051 = smul.addr %s1050, 640
        %s1052 = scalar_lea.vmem [#allocation8], %s1051
        // Predicated region
        $region45: #{tpu_custom_call.1} parent=31 // pred_check
          %p1053 = pneg %p107
        $region46: #{tpu_custom_call.1} parent=31 // pred_check_branch
          %1055 = sbr.rel (%p1053) target = $region48
        $region47: #{tpu_custom_call.1} parent=31 // pred_region
          %s1056 = smul.u32 20, %s21
          %s1057 = ssub.s32 38, %s1056
          %p1058 = scmp.lt.s32.totalorder %s1057, 20
          %s1059 = scalar_select %p1058, %s1057, 20
          %s1060 = smul.u32 128, %s1059
          %s1061 = smul.u32 %s1060, 4
          %s1063 = ssub.s32 10240, %s1061
          %1064 = vsyncadd %s1049, %s1063
          %p1065 = scmp.ne.s32.totalorder 0, %s1061
          %s1066 = smul.addr %s1056, 4
          %s1067 = smul.addr %s1066, 128
          %s1068 = scalar_lea.hbm %s3, %s1067
          %s1069 = smul.u32 32, %s1059
          %s1070 = sshll.u32 %s1052, 4
          %s1071 = int_to_ptr.vmem [resolvable:$true] %s1070
          %s1072 = sshll.u32 %s1069, 4
          %1076 = dma.vmem_to_hbm [thread:$0]  (%p1065), %s1071, %s1072, %s1068, %s1049, 512, 512, 32
        $region48: #{tpu_custom_call.1} parent=31 // pred_fallthru
          _
      $region32: #{tpu_custom_call.1} parent=5 // pred_fallthru
        _
      %p1077 = scmp.le.s32.totalorder 2, %s16
      // Predicated region
      $region49: #{tpu_custom_call.1} parent=5 // pred_check
        %p1078 = pneg %p1077
      $region50: #{tpu_custom_call.1} parent=5 // pred_check_branch
        %1080 = sbr.rel (%p1078) target = $region52
      $region51: #{tpu_custom_call.1} parent=5 // pred_region
        %s1081 = ssub.s32 %s16, 2
        // Predicated region
        $region53: #{tpu_custom_call.1} parent=51 // pred_check
          %p1082 = pneg %p113
        $region54: #{tpu_custom_call.1} parent=51 // pred_check_branch
          %1084 = sbr.rel (%p1082) target = $region56
        $region55: #{tpu_custom_call.1} parent=51 // pred_region
          %s1085 = sand.u32 %s98, 1
          %s1086 = scalar_lea.sflag [#allocation4], %s1085
          %s1087 = sand.u32 %s98, 1
          %s1088 = smul.addr %s1087, 640
          %s1089 = scalar_lea.vmem [#allocation8], %s1088
          %1090 = dma.done %s1086, 10240
        $region56: #{tpu_custom_call.1} parent=51 // pred_fallthru
          _
      $region52: #{tpu_custom_call.1} parent=5 // pred_fallthru
        _
    $region6: #{tpu_custom_call.1} parent=1 // loop_footer
      %s20 = sadd.s32 1, %s16
    $region7: #{tpu_custom_call.1} parent=1 // loop_footer_branch
      %15 = sbr.rel target = $region3
    $region8: #{tpu_custom_call.1} parent=1 // loop_exit
      _
    %1091 = vsyncpa [#allocation3], 1
    %s1092 = scalar_lea.sflag [#allocation3], 1
    %1093 = vsyncpa %s1092, 1
    %1094 = vsyncpa [#allocation6], 1
    %1095 = vsyncpa [#allocation4], 1
    %s1096 = scalar_lea.sflag [#allocation4], 1
    %1097 = vsyncpa %s1096, 1

</llo_original>
